<compile_context>
chip_gen: v7x
topology: tpu7x:2x2x1
jax: 0.10.0
libtpu: 0.0.40
codegen_flags: <defaults>
</compile_context>

<pallas_src>
import math

import jax
import jax.numpy as jnp
from jax.experimental import pallas as pl
from jax.experimental.pallas import tpu as pltpu


def _scale_kernel(scale_ref, x_ref, o_ref):
    # scale_ref: (1,) float32 in SMEM; x_ref/o_ref: (tile_r, C) tiles in VMEM.
    x = x_ref[...]
    if jnp.issubdtype(x_ref.dtype, jnp.floating):
        # Multiply directly in the input dtype (no f32 round trip of the tile).
        o_ref[...] = x * scale_ref[0].astype(x_ref.dtype)
    else:
        # Integer inputs: scale in f32, truncate back (Scale is a float op in
        # practice; this branch just preserves the previous behaviour).
        o_ref[...] = (x.astype(jnp.float32) * scale_ref[0]).astype(o_ref.dtype)


def _round_up(a: int, b: int) -> int:
    return ((a + b - 1) // b) * b


def _cdiv(a: int, b: int) -> int:
    return -(-a // b)


def _device_kind() -> str:
    try:
        return jax.devices()[0].device_kind.lower()
    except Exception:
        return ""


def _gen_config():
    """Per-generation (target_tile_bytes, vmem_limit_bytes, core_parallel)."""
    kind = _device_kind()
    if "v7" in kind:
        # 3.2 TB/s HBM makes the ~0.35us/step overhead dominant at 2 MiB tiles;
        # 6 MiB tiles -> 24 MiB double-buffered in+out, give the compiler
        # 48 MiB of the 64 MiB physical VMEM.  2 TCs -> core-parallel split.
        return 6 * 1024 * 1024, 48 << 20, True
    if "v6" in kind:
        # 4 MiB tiles -> 16 MiB double-buffered, under the 32 MiB scoped default.
        return 4 * 1024 * 1024, None, False
    # v5e / unknown: scoped VMEM default is only 16 MiB -> stay ~2.5 MiB tiles.
    return 2 * 1024 * 1024 + 512 * 1024, None, False


def _xla_scale(x, scale_f32, dtype):
    if jnp.issubdtype(dtype, jnp.floating):
        return x * scale_f32.astype(dtype)
    return (x.astype(jnp.float32) * scale_f32).astype(dtype)


def _scale_flat_pallas(flat, scale_f32):
    """flat: 1D, size > 0 and divisible by 128.  Returns flat * scale."""
    total = flat.size
    dtype = flat.dtype

    # Largest lane width (multiple of 128, <= 1024) dividing the element count
    # so the (R, C) re-view is free and the output stays lane-dense.
    C = 128
    for cand in (1024, 896, 768, 640, 512, 384, 256, 128):
        if total % cand == 0:
            C = cand
            break
    R = total // C
    flat2d = flat.reshape(R, C)

    # dtype-aware sublane multiple: f32 -> 8, bf16/f16 -> 16, int8/fp8 -> 32.
    itemsize = jnp.dtype(dtype).itemsize
    sub = max(8, 32 // max(itemsize, 1))

    target_bytes, vmem_limit, core_parallel = _gen_config()

    tile_r = (target_bytes // (C * itemsize)) // sub * sub
    tile_r = max(sub, min(tile_r, _round_up(R, sub)))
    # Guarantee >= ~4 grid steps (when R permits) so the pipeline has work to
    # overlap: DMA-in of step i+1 vs compute of i vs DMA-out of i-1.
    tile_r = max(sub, min(tile_r, _round_up(_cdiv(R, 4), sub)))

    grid = (_cdiv(R, tile_r),)  # ragged last row-block handled by masking

    # Keep the parameter as an f32 scalar in SMEM (32-bit scalar path).
    scale_smem = scale_f32.reshape(1)

    def run(semantics):
        params = {"dimension_semantics": (semantics,)}
        if vmem_limit is not None:
            params["vmem_limit_bytes"] = vmem_limit
        return pl.pallas_call(
            _scale_kernel,
            out_shape=jax.ShapeDtypeStruct((R, C), dtype),
            grid=grid,
            in_specs=[
                pl.BlockSpec(memory_space=pltpu.MemorySpace.SMEM),  # scalar
                pl.BlockSpec((tile_r, C), lambda i: (i, 0)),
            ],
            out_specs=pl.BlockSpec((tile_r, C), lambda i: (i, 0)),
            compiler_params=pltpu.CompilerParams(**params),
        )(scale_smem, flat2d)

    core_sem = getattr(pltpu, "CORE_PARALLEL", None)
    if core_parallel and core_sem is not None and grid[0] >= 2:
        try:
            out2d = run(core_sem)  # shard the row grid across both v7x TCs
        except Exception:
            out2d = run(pltpu.PARALLEL)
    else:
        out2d = run(pltpu.PARALLEL)

    return out2d.reshape(-1)


def scale_forward(x: jax.Array, scale: jax.Array) -> jax.Array:
    """Computes x * scale (scale is a 0-d parameter), matching nn.Module Scale."""
    orig_shape = x.shape
    dtype = x.dtype
    total = math.prod(orig_shape) if orig_shape else 1
    scale_f32 = jnp.asarray(scale, dtype=jnp.float32)

    if total == 0:
        return x

    flat = x.reshape(-1)
    prefix = (total // 128) * 128

    if prefix == 0:
        # Fewer than 128 elements: a kernel launch isn't worth it.
        return _xla_scale(flat, scale_f32, dtype).reshape(orig_shape)

    if prefix == total:
        return _scale_flat_pallas(flat, scale_f32).reshape(orig_shape)

    # Non-128-divisible size (rare): kernel on the 128-divisible prefix plus a
    # tiny (<1024-elem) XLA tail — avoids the full-tensor pad + slice traffic.
    head = _scale_flat_pallas(flat[:prefix], scale_f32)
    tail = _xla_scale(flat[prefix:], scale_f32, dtype)
    return jnp.concatenate([head, tail]).reshape(orig_shape)


if __name__ == "__main__":
    key = jax.random.PRNGKey(0)
    # Scale.__init__(init_val=1.0) — use a non-trivial value so the multiply
    # is actually exercised.
    init_val = 1.5
    scale_param = jnp.asarray(init_val, dtype=jnp.float32)

    # Main check: NCHW feature map (the retinanet head use case).
    x = jax.random.normal(key, (2, 4, 16, 16), dtype=jnp.float32)
    y = jax.block_until_ready(scale_forward(x, scale_param))
    assert y.shape == x.shape and y.dtype == x.dtype
    assert jnp.allclose(y, x * init_val, atol=1e-6, rtol=1e-6)

    # Exercise the non-128-divisible prefix + XLA-tail path.
    x2 = jax.random.normal(jax.random.PRNGKey(1), (2, 3, 67), dtype=jnp.float32)
    y2 = jax.block_until_ready(scale_forward(x2, scale_param))
    assert y2.shape == x2.shape and y2.dtype == x2.dtype
    assert jnp.allclose(y2, x2 * init_val, atol=1e-6, rtol=1e-6)

    print("KERNEL_OK")
</pallas_src>

<mosaic_0001>
module attributes {stable_mosaic.version = 11 : i64} {
  func.func @_scale_kernel(%arg0: i32, %arg1: memref<1xf32, #tpu.memory_space<smem>>, %arg2: memref<8x1024xf32, #tpu.memory_space<vmem>>, %arg3: memref<8x1024xf32, #tpu.memory_space<vmem>>) attributes {dimension_semantics = [#tpu.dimension_semantics<parallel>], iteration_bounds = array<i64: 1>, scalar_prefetch = 0 : i64, scratch_operands = 0 : i64, tpu.core_type = #tpu.core_type<tc>, window_params = [{transform_indices = @transform_0, window_bounds = array<i64: 1>}, {transform_indices = @transform_1, window_bounds = array<i64: 8, 1024>}, {transform_indices = @transform_2, window_bounds = array<i64: 8, 1024>}]} {
    %c0 = arith.constant 0 : index
    %c0_0 = arith.constant 0 : index
    %0 = vector.load %arg2[%c0, %c0_0] : memref<8x1024xf32, #tpu.memory_space<vmem>>, vector<8x1024xf32>
    %c0_1 = arith.constant 0 : index
    %1 = memref.load %arg1[%c0_1] : memref<1xf32, #tpu.memory_space<smem>>
    %2 = vector.broadcast %1 : f32 to vector<8x1024xf32>
    %3 = arith.mulf %0, %2 : vector<8x1024xf32>
    %c0_2 = arith.constant 0 : index
    %c0_3 = arith.constant 0 : index
    %4 = vector.load %arg3[%c0_2, %c0_3] : memref<8x1024xf32, #tpu.memory_space<vmem>>, vector<8x1024xf32>
    tpu.vector_store %arg3[%c0_2, %c0_3], %3 {strides = array<i32>} : memref<8x1024xf32, #tpu.memory_space<vmem>>, vector<8x1024xf32>,
    return
  }
  func.func @transform_0(%arg0: i32) -> i32 {
    %c0_i32 = arith.constant 0 : i32
    %c0_i32_0 = arith.constant 0 : i32
    return %c0_i32 : i32
  }
  func.func @transform_1(%arg0: i32) -> (i32, i32) {
    %c0_i32 = arith.constant 0 : i32
    %c0_i32_0 = arith.constant 0 : i32
    return %arg0, %c0_i32 : i32, i32
  }
  func.func @transform_2(%arg0: i32) -> (i32, i32) {
    %c0_i32 = arith.constant 0 : i32
    %c0_i32_0 = arith.constant 0 : i32
    return %arg0, %c0_i32 : i32, i32
  }
}

</mosaic_0001>

<llo_original>
// kernel: tpu_custom_call.1
$region0: #{tpu_custom_call.1}
  #allocation0 [shape = 'u32[]', space=smem, size = 0x4, offset = 0x4, fixed_abs, tag = 'smem constant byte address 0x4 - core index']
  #allocation1 [shape = 'u32[144,128]{1,0:T(1,128)}', space=vmem, size = 0x12000, scoped, tag = 'internal scratch']
  #allocation2 [shape = 'f32[1]{0:T(128)S(6)}', space=smem, size = 0x200, scoped, tag = 'scoped memory for tpu_custom_call.1']
  %s0 = inlined_call_operand.<no memory space> [shape: f32[1], index: 0, kind: input, shape index: {}]
  %s1 = inlined_call_operand.hbm [shape: f32[2,1024], index: 1, kind: input, shape index: {}]
  %s2 = inlined_call_operand.hbm [shape: f32[2,1024], index: 2, kind: output, shape index: {}]
  %s3 = sld [smem:[#allocation0]]
  $region22: #{tpu_custom_call.1} parent=0
    _
  %s5 = ssub.s32 1, %s3
  %s6 = scalar_select 0, %s5, %s3
  %7 = sst [smem:[#allocation2]] %s0
  $region1: #{tpu_custom_call.1} parent=0
    #allocation3 [shape = 'u8[32768]{0}', space=vmem, size = 0x8000, scoped, tag = 'input window, operand 1, single buffered']
    #allocation4 [shape = 's32[1]{0}', space=sflag, size = 0x4, scoped, tag = 'scoped memory for tpu_custom_call.1']
    #allocation5 [shape = 's32[1]{0}', space=sflag, size = 0x4, scoped, tag = 'scoped memory for tpu_custom_call.1']
    #allocation6 [shape = 'u8[32768]{0}', space=vmem, size = 0x8000, scoped, tag = 'output window, operand 0, single buffered']
    %8 = vsyncpa [#allocation4], 0
    %9 = vsyncpa [#allocation5], 0
    // Predicated region
    $region2: #{tpu_custom_call.1} parent=1 // pred_check
      _
    $region3: #{tpu_custom_call.1} parent=1 // pred_check_branch
      %11 = sbr.rel (0) target = $region5
    $region4: #{tpu_custom_call.1} parent=1 // pred_region
      _
    $region5: #{tpu_custom_call.1} parent=1 // pred_fallthru
      _
    // Predicated region
    $region6: #{tpu_custom_call.1} parent=1 // pred_check
      _
    $region7: #{tpu_custom_call.1} parent=1 // pred_check_branch
      %13 = sbr.rel (0) target = $region9
    $region8: #{tpu_custom_call.1} parent=1 // pred_region
      %s15 = ssub.s32 1024, 256
      %16 = vsyncadd [#allocation4], %s15
      %s17 = sshll.u32 [#allocation3], 4
      %s18 = int_to_ptr.vmem [resolvable:$true] %s17
      %23 = dma.hbm_to_vmem [thread:$0]  %s1, 256, %s18, [#allocation4], 256, 256, 16
    $region9: #{tpu_custom_call.1} parent=1 // pred_fallthru
      _
    // Predicated region
    $region10: #{tpu_custom_call.1} parent=1 // pred_check
      _
    $region11: #{tpu_custom_call.1} parent=1 // pred_check_branch
      %25 = sbr.rel (0) target = $region13
    $region12: #{tpu_custom_call.1} parent=1 // pred_region
      %26 = dma.done [#allocation4], 1024
    $region13: #{tpu_custom_call.1} parent=1 // pred_fallthru
      _
    %v27 = vld [vmem:[#allocation3] sm:$0xff]
    %v28 = vld [vmem:[#allocation3 + $0x8] sm:$0xff]
    %v29 = vld [vmem:[#allocation3 + $0x10] sm:$0xff]
    %v30 = vld [vmem:[#allocation3 + $0x18] sm:$0xff]
    %v31 = vld [vmem:[#allocation3 + $0x20] sm:$0xff]
    %v32 = vld [vmem:[#allocation3 + $0x28] sm:$0xff]
    %v33 = vld [vmem:[#allocation3 + $0x30] sm:$0xff]
    %v34 = vld [vmem:[#allocation3 + $0x38] sm:$0xff]
    %s35 = sld [smem:[#allocation2]]
    %v36 = vstv %s35
    %v37 = vmul.f32 %v27, %v36
    %v38 = vmul.f32 %v28, %v36
    %v39 = vmul.f32 %v29, %v36
    %v40 = vmul.f32 %v30, %v36
    %v41 = vmul.f32 %v31, %v36
    %v42 = vmul.f32 %v32, %v36
    %v43 = vmul.f32 %v33, %v36
    %v44 = vmul.f32 %v34, %v36
    %45 = vst [vmem:[#allocation6] sm:$0xff] %v37
    %46 = vst [vmem:[#allocation6 + $0x8] sm:$0xff] %v38
    %47 = vst [vmem:[#allocation6 + $0x10] sm:$0xff] %v39
    %48 = vst [vmem:[#allocation6 + $0x18] sm:$0xff] %v40
    %49 = vst [vmem:[#allocation6 + $0x20] sm:$0xff] %v41
    %50 = vst [vmem:[#allocation6 + $0x28] sm:$0xff] %v42
    %51 = vst [vmem:[#allocation6 + $0x30] sm:$0xff] %v43
    %52 = vst [vmem:[#allocation6 + $0x38] sm:$0xff] %v44
    // Predicated region
    $region14: #{tpu_custom_call.1} parent=1 // pred_check
      _
    $region15: #{tpu_custom_call.1} parent=1 // pred_check_branch
      %54 = sbr.rel (0) target = $region17
    $region16: #{tpu_custom_call.1} parent=1 // pred_region
      %s56 = ssub.s32 1024, 256
      %57 = vsyncadd [#allocation5], %s56
      %s58 = sshll.u32 [#allocation6], 4
      %s59 = int_to_ptr.vmem [resolvable:$true] %s58
      %64 = dma.vmem_to_hbm [thread:$0]  %s59, 256, %s2, [#allocation5], 256, 256, 16
    $region17: #{tpu_custom_call.1} parent=1 // pred_fallthru
      _
    // Predicated region
    $region18: #{tpu_custom_call.1} parent=1 // pred_check
      _
    $region19: #{tpu_custom_call.1} parent=1 // pred_check_branch
      %66 = sbr.rel (0) target = $region21
    $region20: #{tpu_custom_call.1} parent=1 // pred_region
      %67 = dma.done [#allocation5], 1024
    $region21: #{tpu_custom_call.1} parent=1 // pred_fallthru
      _
    %68 = vsyncpa [#allocation4], 1
    %69 = vsyncpa [#allocation5], 1

</llo_original>
